<compile_context>
chip_gen: v7x
topology: tpu7x:2x2x1
jax: 0.10.0
libtpu: 0.0.40
codegen_flags: <defaults>
</compile_context>

<pallas_src>
import math

import jax
import jax.numpy as jnp
from jax.experimental import pallas as pl
from jax.experimental.pallas import tpu as pltpu


# ---------------------------------------------------------------------------
# Kernel: one (B-block, N-block, K-block) step of  out = x @ W^T + b
#   x_ref : (tb, tk)  input dtype  -- flattened-activation tile (cast in-kernel)
#   w_ref : (tn, tk)  weight dtype -- lane-dense weight tile (last dim = K)
#   b_ref : (1,  tn)  f32          -- bias slice (initializes the accumulator)
#   o_ref : (tb, tn)  out dtype    -- written once, at the last K step
#   acc   : (tb, tn)  f32 VMEM scratch accumulator (resident across K axis)
# ---------------------------------------------------------------------------
def _xwt_bias_kernel(x_ref, w_ref, b_ref, o_ref, acc_ref):
    k = pl.program_id(2)

    @pl.when(k == 0)
    def _():
        # Start the f32 accumulator at the broadcast bias: no separate
        # bias-add pass at finalize.
        acc_ref[...] = jnp.broadcast_to(b_ref[...], acc_ref.shape)

    # Cast to bf16 inside the kernel (VPU is otherwise idle); operands were
    # DMA'd in their original dtype so there is no extra HBM cast pass.
    acc_ref[...] += jax.lax.dot_general(
        x_ref[...].astype(jnp.bfloat16),
        w_ref[...].astype(jnp.bfloat16),
        dimension_numbers=(((1,), (1,)), ((), ())),   # contract last dims: x @ W^T
        preferred_element_type=jnp.float32,
    )

    @pl.when(k == pl.num_programs(2) - 1)
    def _():
        o_ref[...] = acc_ref[...].astype(o_ref.dtype)


# ---------------------------------------------------------------------------
# Tile selection (generation-aware VMEM budget)
# ---------------------------------------------------------------------------
def _vmem_budget_bytes():
    """VMEM budget for the kernel working set.

    v7x has 64 MiB/TensorCore of physical VMEM, v5e/v6e 128 MiB; keep the
    working set at <= half of physical (capped) so Mosaic has headroom on
    every generation.
    """
    try:
        phys = pltpu.get_tpu_info().vmem_capacity_bytes
    except Exception:
        phys = 64 << 20            # assume the smallest (v7x) if the query fails
    return min(phys // 2, 56 << 20)


def _pick_b_tile(b, max_tb=256):
    if b <= max_tb:
        return b                    # full extent is always a legal block size
    for tb in range(max_tb, 7, -8):  # sublane-aligned divisors
        if b % tb == 0:
            return tb
    return b                        # odd huge batch: single full-extent block


def _pick_n_tile(n):
    # n is padded to a multiple of 128 by the wrapper; 128 keeps the W tile
    # small and is MXU-width-friendly on every generation (v5e is 128-wide).
    return 128 if n % 128 == 0 else n


def _pick_k_tile(d, tb, tn, budget_bytes, in_bytes=4, out_bytes=4):
    """Largest K tile keeping double-buffered tiles inside the VMEM budget.

    Collapses the K grid to a single step whenever D fits (the common case),
    removing per-step overhead and accumulator read-modify-writes.
    """
    fixed = 2 * tb * tn * out_bytes + tb * tn * 4 + 2 * tn * 4
    per_k = 2 * (tb + tn) * in_bytes          # double-buffered x and W tiles
    max_tk = max(128, (budget_bytes - fixed) // per_k)
    if d <= max_tk:
        return d                              # single K step
    limit = (int(max_tk) // 128) * 128
    for tk in range(limit, 127, -128):
        if d % tk == 0:
            return tk
    return d   # D has no 128-multiple divisor under the cap: one full K block


# ---------------------------------------------------------------------------
# Wrapper: out[i, n] = sum_k x[i, k] * w[n, k] + b[n]
# ---------------------------------------------------------------------------
def _linear_xwt(x2d, w, b, out_dtype):
    """bf16 MXU matmul with f32 accumulation. `w`/`b` output dim N should be
    padded to a multiple of 128 for lane-dense (unmasked) output stores."""
    B, D = x2d.shape
    N, Dw = w.shape
    assert D == Dw and b.shape == (N,)

    budget = _vmem_budget_bytes()
    tb = _pick_b_tile(B)
    tn = _pick_n_tile(N)
    xb = jnp.dtype(x2d.dtype).itemsize
    wb = jnp.dtype(w.dtype).itemsize
    ob = jnp.dtype(out_dtype).itemsize
    tk = _pick_k_tile(D, tb, tn, budget, in_bytes=max(xb, wb), out_bytes=ob)

    b2 = b.reshape(1, N).astype(jnp.float32)

    # Working-set estimate (double-buffered inputs/outputs + f32 scratch).
    footprint = (2 * tb * tk * xb + 2 * tn * tk * wb
                 + 2 * tb * tn * ob + tb * tn * 4 + 2 * tn * 4)
    vmem_limit = None
    if footprint + (4 << 20) > (16 << 20):   # above smallest scoped default (v5e)
        vmem_limit = int(min(budget, footprint + (4 << 20)))

    return pl.pallas_call(
        _xwt_bias_kernel,
        out_shape=jax.ShapeDtypeStruct((B, N), out_dtype),
        grid_spec=pltpu.PrefetchScalarGridSpec(
            num_scalar_prefetch=0,
            grid=(B // tb, N // tn, D // tk),
            in_specs=[
                pl.BlockSpec((tb, tk), lambda i, j, k: (i, k)),   # x tile
                pl.BlockSpec((tn, tk), lambda i, j, k: (j, k)),   # lane-dense W
                pl.BlockSpec((1, tn), lambda i, j, k: (0, j)),    # bias slice
            ],
            out_specs=pl.BlockSpec((tb, tn), lambda i, j, k: (i, j)),
            scratch_shapes=[pltpu.VMEM((tb, tn), jnp.float32)],
        ),
        compiler_params=pltpu.CompilerParams(
            # B and N blocks are independent -> 'parallel' (megacore sharding
            # on v7x once there is >1 block); K is the reduction axis, last.
            dimension_semantics=("parallel", "parallel", "arbitrary"),
            vmem_limit_bytes=vmem_limit,
        ),
    )(x2d, w, b2)


# ---------------------------------------------------------------------------
# Ensemble forward
# ---------------------------------------------------------------------------
def precompute_ensemble_params(weights, biases, mode="mean"):
    """Fold the ensemble into one effective, N-padded weight/bias.

    mode='mean': mean_m(x @ W_m^T + b_m) == x @ mean_m(W)^T + mean_m(b)
                 -> single (Cout, D) weight (mean taken in f32).
    mode='ind' : stack members into one wide (M*Cout, D) weight so the whole
                 ensemble is a single MXU pass.

    Call once per parameter set and reuse across forwards; recomputing per
    call re-reads all M*Cout*D weights from HBM before the kernel even runs.
    """
    M, Cout, D = weights.shape
    if mode == "mean":
        w_eff = jnp.mean(weights.astype(jnp.float32), axis=0)    # (Cout, D)
        b_eff = jnp.mean(biases.astype(jnp.float32), axis=0)     # (Cout,)
        n_valid = Cout
    elif mode == "ind":
        w_eff = weights.reshape(M * Cout, D)                     # (M*Cout, D)
        b_eff = biases.reshape(M * Cout)
        n_valid = M * Cout
    else:
        raise NotImplementedError(mode)
    # Zero-pad the output dim up to a multiple of 128 -> lane-dense stores.
    n_pad = (-n_valid) % 128
    if n_pad:
        w_eff = jnp.pad(w_eff, ((0, n_pad), (0, 0)))
        b_eff = jnp.pad(b_eff, ((0, n_pad),))
    return w_eff, b_eff, n_valid


def ensemble_forward(x_nchw, weights, biases, mode="mean", params=None):
    """EnsembleModel.forward for an ensemble of Flatten + Linear(D->Cout).

    x_nchw : (B, C, H, W); weights: (M, Cout, D) stacked torch nn.Linear
    weights (out_features, in_features); biases: (M, Cout).
    mode='mean' -> (B, Cout); mode='ind' -> (M, B, Cout) like torch.stack(dim=0).
    """
    if params is None:
        params = precompute_ensemble_params(weights, biases, mode)
    w_eff, b_eff, n_valid = params

    B = x_nchw.shape[0]
    D = math.prod(x_nchw.shape[1:])            # torch.nn.Flatten (row-major)
    x2d = x_nchw.reshape(B, D)

    out = _linear_xwt(x2d, w_eff, b_eff, out_dtype=x_nchw.dtype)   # (B, Npad)
    out = out[:, :n_valid]                      # drop lane padding

    if mode == "mean":
        return out                              # (B, Cout)
    M, Cout, _ = weights.shape
    return out.reshape(B, M, Cout).transpose(1, 0, 2)   # (M, B, Cout)


if __name__ == "__main__":
    # Small shapes consistent with the module's forward:
    # batch=2, channels=4, spatial=16x16, 4 ensemble members, 10 classes.
    B, C, H, W = 2, 4, 16, 16
    M, Cout = 4, 10
    D = C * H * W

    key = jax.random.PRNGKey(0)
    kx, kw, kb = jax.random.split(key, 3)

    x = jax.random.normal(kx, (B, C, H, W), dtype=jnp.float32)
    # stacked nn.Linear(D, Cout) params: weight is (out_features, in_features)
    weights = jax.random.normal(kw, (M, Cout, D), dtype=jnp.float32) * 0.02
    biases = jax.random.normal(kb, (M, Cout), dtype=jnp.float32) * 0.1

    # Precompute effective params once (cacheable across forwards).
    mean_params = precompute_ensemble_params(weights, biases, mode="mean")
    ind_params = precompute_ensemble_params(weights, biases, mode="ind")

    out_mean = jax.block_until_ready(
        ensemble_forward(x, weights, biases, mode="mean", params=mean_params))
    out_ind = jax.block_until_ready(
        ensemble_forward(x, weights, biases, mode="ind", params=ind_params))

    # Plain-JAX f32 reference (per-member outputs stacked, like the module).
    x_flat = x.reshape(B, D)
    ref_stack = jnp.stack(
        [x_flat @ weights[m].T + biases[m] for m in range(M)], axis=0
    )
    ref_mean = jnp.mean(ref_stack, axis=0)

    assert out_mean.shape == (B, Cout)
    assert out_ind.shape == (M, B, Cout)
    # bf16 MXU operands with f32 accumulation vs f32 reference -> loose tol.
    assert jnp.allclose(out_mean, ref_mean, atol=5e-2, rtol=5e-2)
    assert jnp.allclose(out_ind, ref_stack, atol=5e-2, rtol=5e-2)

    print("KERNEL_OK")
</pallas_src>

<mosaic_0001>
module attributes {stable_mosaic.version = 11 : i64} {
  func.func @_xwt_bias_kernel(%arg0: i32, %arg1: i32, %arg2: i32, %arg3: memref<2x1024xf32, #tpu.memory_space<vmem>>, %arg4: memref<128x1024xf32, #tpu.memory_space<vmem>>, %arg5: memref<1x128xf32, #tpu.memory_space<vmem>>, %arg6: memref<2x128xf32, #tpu.memory_space<vmem>>, %arg7: memref<2x128xf32, #tpu.memory_space<vmem>>) attributes {dimension_semantics = [#tpu.dimension_semantics<parallel>, #tpu.dimension_semantics<parallel>, #tpu.dimension_semantics<arbitrary>], iteration_bounds = array<i64: 1, 1, 1>, scalar_prefetch = 0 : i64, scratch_operands = 1 : i64, tpu.core_type = #tpu.core_type<tc>, window_params = [{transform_indices = @transform_0, window_bounds = array<i64: 2, 1024>}, {transform_indices = @transform_1, window_bounds = array<i64: 128, 1024>}, {transform_indices = @transform_2, window_bounds = array<i64: 1, 128>}, {transform_indices = @transform_3, window_bounds = array<i64: 2, 128>}]} {
    %c0_i32 = arith.constant 0 : i32
    %0 = arith.cmpi eq, %arg2, %c0_i32 : i32
    %1 = arith.extui %0 : i1 to i32
    %c0_i32_0 = arith.constant 0 : i32
    %2 = arith.cmpi ne, %1, %c0_i32_0 : i32
    scf.if %2 {
      %c0_10 = arith.constant 0 : index
      %c0_11 = arith.constant 0 : index
      %14 = vector.load %arg5[%c0_10, %c0_11] : memref<1x128xf32, #tpu.memory_space<vmem>>, vector<1x128xf32>
      %15 = vector.shape_cast %14 : vector<1x128xf32> to vector<1x128xf32>
      %16 = vector.broadcast %15 : vector<1x128xf32> to vector<2x128xf32>
      %c0_12 = arith.constant 0 : index
      %c0_13 = arith.constant 0 : index
      %17 = vector.load %arg7[%c0_12, %c0_13] : memref<2x128xf32, #tpu.memory_space<vmem>>, vector<2x128xf32>
      tpu.vector_store %arg7[%c0_12, %c0_13], %16 {strides = array<i32>} : memref<2x128xf32, #tpu.memory_space<vmem>>, vector<2x128xf32>,
    } else {
    }
    %c0 = arith.constant 0 : index
    %c0_1 = arith.constant 0 : index
    %3 = vector.load %arg7[%c0, %c0_1] : memref<2x128xf32, #tpu.memory_space<vmem>>, vector<2x128xf32>
    %c0_2 = arith.constant 0 : index
    %c0_3 = arith.constant 0 : index
    %4 = vector.load %arg3[%c0_2, %c0_3] : memref<2x1024xf32, #tpu.memory_space<vmem>>, vector<2x1024xf32>
    %5 = arith.truncf %4 : vector<2x1024xf32> to vector<2x1024xbf16>
    %c0_4 = arith.constant 0 : index
    %c0_5 = arith.constant 0 : index
    %6 = vector.load %arg4[%c0_4, %c0_5] : memref<128x1024xf32, #tpu.memory_space<vmem>>, vector<128x1024xf32>
    %7 = arith.truncf %6 : vector<128x1024xf32> to vector<128x1024xbf16>
    %cst = arith.constant dense<0.000000e+00> : vector<2x128xf32>
    %8 = tpu.matmul %5, %7, %cst {dimension_numbers = #tpu.dot_dimension_numbers<[1], [1], [0], [0], [0, 0, 1, 0], [], []>} : vector<2x1024xbf16>, vector<128x1024xbf16>, vector<2x128xf32> -> vector<2x128xf32>
    %9 = arith.addf %3, %8 : vector<2x128xf32>
    %c0_6 = arith.constant 0 : index
    %c0_7 = arith.constant 0 : index
    %10 = vector.load %arg7[%c0_6, %c0_7] : memref<2x128xf32, #tpu.memory_space<vmem>>, vector<2x128xf32>
    tpu.vector_store %arg7[%c0_6, %c0_7], %9 {strides = array<i32>} : memref<2x128xf32, #tpu.memory_space<vmem>>, vector<2x128xf32>,
    %c0_i32_8 = arith.constant 0 : i32
    %11 = arith.cmpi eq, %arg2, %c0_i32_8 : i32
    %12 = arith.extui %11 : i1 to i32
    %c0_i32_9 = arith.constant 0 : i32
    %13 = arith.cmpi ne, %12, %c0_i32_9 : i32
    scf.if %13 {
      %c0_10 = arith.constant 0 : index
      %c0_11 = arith.constant 0 : index
      %14 = vector.load %arg7[%c0_10, %c0_11] : memref<2x128xf32, #tpu.memory_space<vmem>>, vector<2x128xf32>
      %c0_12 = arith.constant 0 : index
      %c0_13 = arith.constant 0 : index
      %15 = vector.load %arg6[%c0_12, %c0_13] : memref<2x128xf32, #tpu.memory_space<vmem>>, vector<2x128xf32>
      tpu.vector_store %arg6[%c0_12, %c0_13], %14 {strides = array<i32>} : memref<2x128xf32, #tpu.memory_space<vmem>>, vector<2x128xf32>,
    } else {
    }
    return
  }
  func.func @transform_0(%arg0: i32, %arg1: i32, %arg2: i32) -> (i32, i32) {
    %c0_i32 = arith.constant 0 : i32
    return %arg0, %arg2 : i32, i32
  }
  func.func @transform_1(%arg0: i32, %arg1: i32, %arg2: i32) -> (i32, i32) {
    %c0_i32 = arith.constant 0 : i32
    return %arg1, %arg2 : i32, i32
  }
  func.func @transform_2(%arg0: i32, %arg1: i32, %arg2: i32) -> (i32, i32) {
    %c0_i32 = arith.constant 0 : i32
    %c0_i32_0 = arith.constant 0 : i32
    return %c0_i32, %arg1 : i32, i32
  }
  func.func @transform_3(%arg0: i32, %arg1: i32, %arg2: i32) -> (i32, i32) {
    %c0_i32 = arith.constant 0 : i32
    return %arg0, %arg1 : i32, i32
  }
}

</mosaic_0001>

<llo_original>
// kernel: tpu_custom_call.1
$region0: #{tpu_custom_call.1}
  #allocation0 [shape = 'u32[]', space=smem, size = 0x4, offset = 0x4, fixed_abs, tag = 'smem constant byte address 0x4 - core index']
  #allocation1 [shape = 'u32[144,128]{1,0:T(1,128)}', space=vmem, size = 0x12000, scoped, tag = 'internal scratch']
  #allocation2 [shape = 'f32[2,128]{1,0:T(2,128)}', space=vmem, size = 0x400, scoped, tag = 'scratch operand']
  %s0 = inlined_call_operand.hbm [shape: f32[2,1024], index: 0, kind: input, shape index: {}]
  %s1 = inlined_call_operand.hbm [shape: f32[128,1024], index: 1, kind: input, shape index: {}]
  %s2 = inlined_call_operand.vmem [shape: f32[1,128], index: 2, kind: input, shape index: {}]
  %s3 = inlined_call_operand.hbm [shape: f32[2,128], index: 3, kind: output, shape index: {}]
  %s4 = sld [smem:[#allocation0]]
  $region38: #{tpu_custom_call.1} parent=0
    _
  %s6 = ssub.s32 1, %s4
  %s7 = scalar_select 0, %s6, %s4
  $region1: #{tpu_custom_call.1} parent=0
    #allocation3 [shape = 'u8[8192]{0}', space=vmem, size = 0x2000, scoped, tag = 'input window, operand 0, single buffered']
    #allocation4 [shape = 's32[1]{0}', space=sflag, size = 0x4, scoped, tag = 'scoped memory for tpu_custom_call.1']
    #allocation5 [shape = 's32[1]{0}', space=sflag, size = 0x4, scoped, tag = 'scoped memory for tpu_custom_call.1']
    #allocation6 [shape = 'u8[524288]{0}', space=vmem, size = 0x80000, scoped, tag = 'input window, operand 1, single buffered']
    #allocation7 [shape = 's32[1]{0}', space=sflag, size = 0x4, scoped, tag = 'scoped memory for tpu_custom_call.1']
    #allocation8 [shape = 'u8[1024]{0}', space=vmem, size = 0x400, scoped, tag = 'output window, operand 0, single buffered']
    %8 = vsyncpa [#allocation4], 0
    %9 = vsyncpa [#allocation7], 0
    %10 = vsyncpa [#allocation5], 0
    // Predicated region
    $region2: #{tpu_custom_call.1} parent=1 // pred_check
      _
    $region3: #{tpu_custom_call.1} parent=1 // pred_check_branch
      %12 = sbr.rel (0) target = $region5
    $region4: #{tpu_custom_call.1} parent=1 // pred_region
      %s14 = ssub.s32 256, 256
      %15 = vsyncadd [#allocation4], %s14
      %s17 = sshll.u32 [#allocation3], 4
      %s18 = int_to_ptr.vmem [resolvable:$true] %s17
      %20 = dma.hbm_to_vmem [thread:$0]  %s0, 256, %s18, [#allocation4]
    $region5: #{tpu_custom_call.1} parent=1 // pred_fallthru
      _
    // Predicated region
    $region6: #{tpu_custom_call.1} parent=1 // pred_check
      _
    $region7: #{tpu_custom_call.1} parent=1 // pred_check_branch
      %22 = sbr.rel (0) target = $region9
    $region8: #{tpu_custom_call.1} parent=1 // pred_region
      %s24 = ssub.s32 16384, 16384
      %25 = vsyncadd [#allocation7], %s24
      %s26 = sshll.u32 [#allocation6], 4
      %s27 = int_to_ptr.vmem [resolvable:$true] %s26
      %32 = dma.hbm_to_vmem [thread:$0]  %s1, 16384, %s27, [#allocation7], 1024, 1024, 64
    $region9: #{tpu_custom_call.1} parent=1 // pred_fallthru
      _
    // Predicated region
    $region10: #{tpu_custom_call.1} parent=1 // pred_check
      _
    $region11: #{tpu_custom_call.1} parent=1 // pred_check_branch
      %34 = sbr.rel (0) target = $region13
    $region12: #{tpu_custom_call.1} parent=1 // pred_region
      _
    $region13: #{tpu_custom_call.1} parent=1 // pred_fallthru
      _
    // Predicated region
    $region14: #{tpu_custom_call.1} parent=1 // pred_check
      _
    $region15: #{tpu_custom_call.1} parent=1 // pred_check_branch
      %36 = sbr.rel (0) target = $region17
    $region16: #{tpu_custom_call.1} parent=1 // pred_region
      %37 = dma.done [#allocation4], 256
    $region17: #{tpu_custom_call.1} parent=1 // pred_fallthru
      _
    // Predicated region
    $region18: #{tpu_custom_call.1} parent=1 // pred_check
      _
    $region19: #{tpu_custom_call.1} parent=1 // pred_check_branch
      %39 = sbr.rel (0) target = $region21
    $region20: #{tpu_custom_call.1} parent=1 // pred_region
      %40 = dma.done [#allocation7], 16384
    $region21: #{tpu_custom_call.1} parent=1 // pred_fallthru
      _
    %p42 = scmp.eq.s32.totalorder 0, 0
    // Predicated region
    $region22: #{tpu_custom_call.1} parent=1 // pred_check
      %p43 = pneg %p42
    $region23: #{tpu_custom_call.1} parent=1 // pred_check_branch
      %45 = sbr.rel (%p43) target = $region25
    $region24: #{tpu_custom_call.1} parent=1 // pred_region
      %v46 = vld [vmem:[%s2] sm:$0x1]
      %v48 = vlaneseq
      %v49 = vshrl.u32 %v48, 7
      %v50 = vsub.s32 0, %v49
      %v51 = vrot.slane %v46, %v50
      %53 = vst [vmem:[#allocation2] sm:$0x3] %v51
    $region25: #{tpu_custom_call.1} parent=1 // pred_fallthru
      _
    %v54 = vld [vmem:[#allocation2] sm:$0x3]
    %v55 = vld [vmem:[#allocation3] sm:$0xff]
    %v56 = vld [vmem:[#allocation3 + $0x8] sm:$0xff]
    %v59 = vcombine.high %v55, %v55
    %v61 = vunpack.c.l.s4 1983009808
    %v62 = vunpack.c.0.s8 %v61
    %v63 = vlaneseq
    %v64 = vshrl.u32 %v63, 7
    %v65 = vsub.s32 %v62, %v64
    %v66 = vrot.slane %v55, %v65
    %v68 = vunpack.c.l.s4 1983009808
    %v69 = vunpack.c.0.s8 %v68
    %v70 = vlaneseq
    %v71 = vshrl.u32 %v70, 7
    %v72 = vsub.s32 %v69, %v71
    %v73 = vrot.slane %v59, %v72
    %v74 = vcombine.high %v66, %v66
    %v75 = vcombine.high %v73, %v73
    %v76 = vcombine.high %v56, %v56
    %v78 = vunpack.c.l.s4 1983009808
    %v79 = vunpack.c.0.s8 %v78
    %v80 = vlaneseq
    %v81 = vshrl.u32 %v80, 7
    %v82 = vsub.s32 %v79, %v81
    %v83 = vrot.slane %v56, %v82
    %v85 = vunpack.c.l.s4 1983009808
    %v86 = vunpack.c.0.s8 %v85
    %v87 = vlaneseq
    %v88 = vshrl.u32 %v87, 7
    %v89 = vsub.s32 %v86, %v88
    %v90 = vrot.slane %v76, %v89
    %v91 = vcombine.high %v83, %v83
    %v92 = vcombine.high %v90, %v90
    %v101 = vpack.c.bf16 %v66, %v66
    %v102 = vpack.c.bf16 %v74, %v74
    %v103 = vpack.c.bf16 %v73, %v73
    %v104 = vpack.c.bf16 %v75, %v75
    %v105 = vpack.c.bf16 %v83, %v83
    %v106 = vpack.c.bf16 %v91, %v91
    %v107 = vpack.c.bf16 %v90, %v90
    %v108 = vpack.c.bf16 %v92, %v92
    %v109 = vld [vmem:[#allocation6] sm:$0xff]
    %v110 = vld [vmem:[#allocation6 + $0x8] sm:$0xff]
    %v111 = vld [vmem:[#allocation6 + $0x10] sm:$0xff]
    %v112 = vld [vmem:[#allocation6 + $0x18] sm:$0xff]
    %v113 = vld [vmem:[#allocation6 + $0x20] sm:$0xff]
    %v114 = vld [vmem:[#allocation6 + $0x28] sm:$0xff]
    %v115 = vld [vmem:[#allocation6 + $0x30] sm:$0xff]
    %v116 = vld [vmem:[#allocation6 + $0x38] sm:$0xff]
    %v117 = vld [vmem:[#allocation6 + $0x40] sm:$0xff]
    %v118 = vld [vmem:[#allocation6 + $0x48] sm:$0xff]
    %v119 = vld [vmem:[#allocation6 + $0x50] sm:$0xff]
    %v120 = vld [vmem:[#allocation6 + $0x58] sm:$0xff]
    %v121 = vld [vmem:[#allocation6 + $0x60] sm:$0xff]
    %v122 = vld [vmem:[#allocation6 + $0x68] sm:$0xff]
    %v123 = vld [vmem:[#allocation6 + $0x70] sm:$0xff]
    %v124 = vld [vmem:[#allocation6 + $0x78] sm:$0xff]
    %v125 = vld [vmem:[#allocation6 + $0x80] sm:$0xff]
    %v126 = vld [vmem:[#allocation6 + $0x88] sm:$0xff]
    %v127 = vld [vmem:[#allocation6 + $0x90] sm:$0xff]
    %v128 = vld [vmem:[#allocation6 + $0x98] sm:$0xff]
    %v129 = vld [vmem:[#allocation6 + $0xa0] sm:$0xff]
    %v130 = vld [vmem:[#allocation6 + $0xa8] sm:$0xff]
    %v131 = vld [vmem:[#allocation6 + $0xb0] sm:$0xff]
    %v132 = vld [vmem:[#allocation6 + $0xb8] sm:$0xff]
    %v133 = vld [vmem:[#allocation6 + $0xc0] sm:$0xff]
    %v134 = vld [vmem:[#allocation6 + $0xc8] sm:$0xff]
    %v135 = vld [vmem:[#allocation6 + $0xd0] sm:$0xff]
    %v136 = vld [vmem:[#allocation6 + $0xd8] sm:$0xff]
    %v137 = vld [vmem:[#allocation6 + $0xe0] sm:$0xff]
    %v138 = vld [vmem:[#allocation6 + $0xe8] sm:$0xff]
    %v139 = vld [vmem:[#allocation6 + $0xf0] sm:$0xff]
    %v140 = vld [vmem:[#allocation6 + $0xf8] sm:$0xff]
    %v141 = vld [vmem:[#allocation6 + $0x100] sm:$0xff]
    %v142 = vld [vmem:[#allocation6 + $0x108] sm:$0xff]
    %v143 = vld [vmem:[#allocation6 + $0x110] sm:$0xff]
    %v144 = vld [vmem:[#allocation6 + $0x118] sm:$0xff]
    %v145 = vld [vmem:[#allocation6 + $0x120] sm:$0xff]
    %v146 = vld [vmem:[#allocation6 + $0x128] sm:$0xff]
    %v147 = vld [vmem:[#allocation6 + $0x130] sm:$0xff]
    %v148 = vld [vmem:[#allocation6 + $0x138] sm:$0xff]
    %v149 = vld [vmem:[#allocation6 + $0x140] sm:$0xff]
    %v150 = vld [vmem:[#allocation6 + $0x148] sm:$0xff]
    %v151 = vld [vmem:[#allocation6 + $0x150] sm:$0xff]
    %v152 = vld [vmem:[#allocation6 + $0x158] sm:$0xff]
    %v153 = vld [vmem:[#allocation6 + $0x160] sm:$0xff]
    %v154 = vld [vmem:[#allocation6 + $0x168] sm:$0xff]
    %v155 = vld [vmem:[#allocation6 + $0x170] sm:$0xff]
    %v156 = vld [vmem:[#allocation6 + $0x178] sm:$0xff]
    %v157 = vld [vmem:[#allocation6 + $0x180] sm:$0xff]
    %v158 = vld [vmem:[#allocation6 + $0x188] sm:$0xff]
    %v159 = vld [vmem:[#allocation6 + $0x190] sm:$0xff]
    %v160 = vld [vmem:[#allocation6 + $0x198] sm:$0xff]
    %v161 = vld [vmem:[#allocation6 + $0x1a0] sm:$0xff]
    %v162 = vld [vmem:[#allocation6 + $0x1a8] sm:$0xff]
    %v163 = vld [vmem:[#allocation6 + $0x1b0] sm:$0xff]
    %v164 = vld [vmem:[#allocation6 + $0x1b8] sm:$0xff]
    %v165 = vld [vmem:[#allocation6 + $0x1c0] sm:$0xff]
    %v166 = vld [vmem:[#allocation6 + $0x1c8] sm:$0xff]
    %v167 = vld [vmem:[#allocation6 + $0x1d0] sm:$0xff]
    %v168 = vld [vmem:[#allocation6 + $0x1d8] sm:$0xff]
    %v169 = vld [vmem:[#allocation6 + $0x1e0] sm:$0xff]
    %v170 = vld [vmem:[#allocation6 + $0x1e8] sm:$0xff]
    %v171 = vld [vmem:[#allocation6 + $0x1f0] sm:$0xff]
    %v172 = vld [vmem:[#allocation6 + $0x1f8] sm:$0xff]
    %v173 = vld [vmem:[#allocation6 + $0x200] sm:$0xff]
    %v174 = vld [vmem:[#allocation6 + $0x208] sm:$0xff]
    %v175 = vld [vmem:[#allocation6 + $0x210] sm:$0xff]
    %v176 = vld [vmem:[#allocation6 + $0x218] sm:$0xff]
    %v177 = vld [vmem:[#allocation6 + $0x220] sm:$0xff]
    %v178 = vld [vmem:[#allocation6 + $0x228] sm:$0xff]
    %v179 = vld [vmem:[#allocation6 + $0x230] sm:$0xff]
    %v180 = vld [vmem:[#allocation6 + $0x238] sm:$0xff]
    %v181 = vld [vmem:[#allocation6 + $0x240] sm:$0xff]
    %v182 = vld [vmem:[#allocation6 + $0x248] sm:$0xff]
    %v183 = vld [vmem:[#allocation6 + $0x250] sm:$0xff]
    %v184 = vld [vmem:[#allocation6 + $0x258] sm:$0xff]
    %v185 = vld [vmem:[#allocation6 + $0x260] sm:$0xff]
    %v186 = vld [vmem:[#allocation6 + $0x268] sm:$0xff]
    %v187 = vld [vmem:[#allocation6 + $0x270] sm:$0xff]
    %v188 = vld [vmem:[#allocation6 + $0x278] sm:$0xff]
    %v189 = vld [vmem:[#allocation6 + $0x280] sm:$0xff]
    %v190 = vld [vmem:[#allocation6 + $0x288] sm:$0xff]
    %v191 = vld [vmem:[#allocation6 + $0x290] sm:$0xff]
    %v192 = vld [vmem:[#allocation6 + $0x298] sm:$0xff]
    %v193 = vld [vmem:[#allocation6 + $0x2a0] sm:$0xff]
    %v194 = vld [vmem:[#allocation6 + $0x2a8] sm:$0xff]
    %v195 = vld [vmem:[#allocation6 + $0x2b0] sm:$0xff]
    %v196 = vld [vmem:[#allocation6 + $0x2b8] sm:$0xff]
    %v197 = vld [vmem:[#allocation6 + $0x2c0] sm:$0xff]
    %v198 = vld [vmem:[#allocation6 + $0x2c8] sm:$0xff]
    %v199 = vld [vmem:[#allocation6 + $0x2d0] sm:$0xff]
    %v200 = vld [vmem:[#allocation6 + $0x2d8] sm:$0xff]
    %v201 = vld [vmem:[#allocation6 + $0x2e0] sm:$0xff]
    %v202 = vld [vmem:[#allocation6 + $0x2e8] sm:$0xff]
    %v203 = vld [vmem:[#allocation6 + $0x2f0] sm:$0xff]
    %v204 = vld [vmem:[#allocation6 + $0x2f8] sm:$0xff]
    %v205 = vld [vmem:[#allocation6 + $0x300] sm:$0xff]
    %v206 = vld [vmem:[#allocation6 + $0x308] sm:$0xff]
    %v207 = vld [vmem:[#allocation6 + $0x310] sm:$0xff]
    %v208 = vld [vmem:[#allocation6 + $0x318] sm:$0xff]
    %v209 = vld [vmem:[#allocation6 + $0x320] sm:$0xff]
    %v210 = vld [vmem:[#allocation6 + $0x328] sm:$0xff]
    %v211 = vld [vmem:[#allocation6 + $0x330] sm:$0xff]
    %v212 = vld [vmem:[#allocation6 + $0x338] sm:$0xff]
    %v213 = vld [vmem:[#allocation6 + $0x340] sm:$0xff]
    %v214 = vld [vmem:[#allocation6 + $0x348] sm:$0xff]
    %v215 = vld [vmem:[#allocation6 + $0x350] sm:$0xff]
    %v216 = vld [vmem:[#allocation6 + $0x358] sm:$0xff]
    %v217 = vld [vmem:[#allocation6 + $0x360] sm:$0xff]
    %v218 = vld [vmem:[#allocation6 + $0x368] sm:$0xff]
    %v219 = vld [vmem:[#allocation6 + $0x370] sm:$0xff]
    %v220 = vld [vmem:[#allocation6 + $0x378] sm:$0xff]
    %v221 = vld [vmem:[#allocation6 + $0x380] sm:$0xff]
    %v222 = vld [vmem:[#allocation6 + $0x388] sm:$0xff]
    %v223 = vld [vmem:[#allocation6 + $0x390] sm:$0xff]
    %v224 = vld [vmem:[#allocation6 + $0x398] sm:$0xff]
    %v225 = vld [vmem:[#allocation6 + $0x3a0] sm:$0xff]
    %v226 = vld [vmem:[#allocation6 + $0x3a8] sm:$0xff]
    %v227 = vld [vmem:[#allocation6 + $0x3b0] sm:$0xff]
    %v228 = vld [vmem:[#allocation6 + $0x3b8] sm:$0xff]
    %v229 = vld [vmem:[#allocation6 + $0x3c0] sm:$0xff]
    %v230 = vld [vmem:[#allocation6 + $0x3c8] sm:$0xff]
    %v231 = vld [vmem:[#allocation6 + $0x3d0] sm:$0xff]
    %v232 = vld [vmem:[#allocation6 + $0x3d8] sm:$0xff]
    %v233 = vld [vmem:[#allocation6 + $0x3e0] sm:$0xff]
    %v234 = vld [vmem:[#allocation6 + $0x3e8] sm:$0xff]
    %v235 = vld [vmem:[#allocation6 + $0x3f0] sm:$0xff]
    %v236 = vld [vmem:[#allocation6 + $0x3f8] sm:$0xff]
    %v237 = vpack.c.bf16 %v117, %v109
    %v238 = vpack.c.bf16 %v118, %v110
    %v239 = vpack.c.bf16 %v119, %v111
    %v240 = vpack.c.bf16 %v120, %v112
    %v241 = vpack.c.bf16 %v121, %v113
    %v242 = vpack.c.bf16 %v122, %v114
    %v243 = vpack.c.bf16 %v123, %v115
    %v244 = vpack.c.bf16 %v124, %v116
    %v245 = vpack.c.bf16 %v133, %v125
    %v246 = vpack.c.bf16 %v134, %v126
    %v247 = vpack.c.bf16 %v135, %v127
    %v248 = vpack.c.bf16 %v136, %v128
    %v249 = vpack.c.bf16 %v137, %v129
    %v250 = vpack.c.bf16 %v138, %v130
    %v251 = vpack.c.bf16 %v139, %v131
    %v252 = vpack.c.bf16 %v140, %v132
    %v253 = vpack.c.bf16 %v149, %v141
    %v254 = vpack.c.bf16 %v150, %v142
    %v255 = vpack.c.bf16 %v151, %v143
    %v256 = vpack.c.bf16 %v152, %v144
    %v257 = vpack.c.bf16 %v153, %v145
    %v258 = vpack.c.bf16 %v154, %v146
    %v259 = vpack.c.bf16 %v155, %v147
    %v260 = vpack.c.bf16 %v156, %v148
    %v261 = vpack.c.bf16 %v165, %v157
    %v262 = vpack.c.bf16 %v166, %v158
    %v263 = vpack.c.bf16 %v167, %v159
    %v264 = vpack.c.bf16 %v168, %v160
    %v265 = vpack.c.bf16 %v169, %v161
    %v266 = vpack.c.bf16 %v170, %v162
    %v267 = vpack.c.bf16 %v171, %v163
    %v268 = vpack.c.bf16 %v172, %v164
    %v269 = vpack.c.bf16 %v181, %v173
    %v270 = vpack.c.bf16 %v182, %v174
    %v271 = vpack.c.bf16 %v183, %v175
    %v272 = vpack.c.bf16 %v184, %v176
    %v273 = vpack.c.bf16 %v185, %v177
    %v274 = vpack.c.bf16 %v186, %v178
    %v275 = vpack.c.bf16 %v187, %v179
    %v276 = vpack.c.bf16 %v188, %v180
    %v277 = vpack.c.bf16 %v197, %v189
    %v278 = vpack.c.bf16 %v198, %v190
    %v279 = vpack.c.bf16 %v199, %v191
    %v280 = vpack.c.bf16 %v200, %v192
    %v281 = vpack.c.bf16 %v201, %v193
    %v282 = vpack.c.bf16 %v202, %v194
    %v283 = vpack.c.bf16 %v203, %v195
    %v284 = vpack.c.bf16 %v204, %v196
    %v285 = vpack.c.bf16 %v213, %v205
    %v286 = vpack.c.bf16 %v214, %v206
    %v287 = vpack.c.bf16 %v215, %v207
    %v288 = vpack.c.bf16 %v216, %v208
    %v289 = vpack.c.bf16 %v217, %v209
    %v290 = vpack.c.bf16 %v218, %v210
    %v291 = vpack.c.bf16 %v219, %v211
    %v292 = vpack.c.bf16 %v220, %v212
    %v293 = vpack.c.bf16 %v229, %v221
    %v294 = vpack.c.bf16 %v230, %v222
    %v295 = vpack.c.bf16 %v231, %v223
    %v296 = vpack.c.bf16 %v232, %v224
    %v297 = vpack.c.bf16 %v233, %v225
    %v298 = vpack.c.bf16 %v234, %v226
    %v299 = vpack.c.bf16 %v235, %v227
    %v300 = vpack.c.bf16 %v236, %v228
    %301 = vmatprep.subr.bf16.mxu0 %v238
    %302 = vmatpush1.bf16.xpose.msra.mxu0 %v237
    %303 = vmatprep.subr.bf16.mxu0 %v246
    %304 = vmatpush1.bf16.xpose.msra.mxu0 %v245
    %305 = vmatprep.subr.bf16.mxu0 %v254
    %306 = vmatpush1.bf16.xpose.msra.mxu0 %v253
    %307 = vmatprep.subr.bf16.mxu0 %v262
    %308 = vmatpush1.bf16.xpose.msra.mxu0 %v261
    %309 = vmatprep.subr.bf16.mxu0 %v270
    %310 = vmatpush1.bf16.xpose.msra.mxu0 %v269
    %311 = vmatprep.subr.bf16.mxu0 %v278
    %312 = vmatpush1.bf16.xpose.msra.mxu0 %v277
    %313 = vmatprep.subr.bf16.mxu0 %v286
    %314 = vmatpush1.bf16.xpose.msra.mxu0 %v285
    %315 = vmatprep.subr.bf16.mxu0 %v294
    %316 = vmatpush1.bf16.xpose.msra.mxu0 %v293
    %317 = vmatprep.subr.bf16.mxu0 0
    %318 = vmatpush1.bf16.xpose.msra.mxu0 0
    %319 = vmatprep.subr.bf16.mxu0 0
    %320 = vmatpush1.bf16.xpose.msra.mxu0 0
    %321 = vmatprep.subr.bf16.mxu0 0
    %322 = vmatpush1.bf16.xpose.msra.mxu0 0
    %323 = vmatprep.subr.bf16.mxu0 0
    %324 = vmatpush1.bf16.xpose.msra.mxu0 0
    %325 = vmatprep.subr.bf16.mxu0 0
    %326 = vmatpush1.bf16.xpose.msra.mxu0 0
    %327 = vmatprep.subr.bf16.mxu0 0
    %328 = vmatpush1.bf16.xpose.msra.mxu0 0
    %329 = vmatprep.subr.bf16.mxu0 0
    %330 = vmatpush1.bf16.xpose.msra.mxu0 0
    %331 = vmatprep.subr.bf16.mxu0 0
    %332 = vmatpush1.bf16.xpose.msra.mxu0 0
    %333 = vmatprep.mubr.bf16.mxu0 %v102
    %334 = vmatmul.mubr.bf16.gmra.mrb[0].mxu0 %v101
    %v335 = vpop.f32.mrb[0].mxu0
    %v336 = vadd.f32 0.0, %v335
    %v337 = vpop.f32.mrb[0].mxu0
    %v338 = vpop.f32.mrb[0].mxu0
    %v339 = vpop.f32.mrb[0].mxu0
    %340 = vdwg.mxu0
    %341 = vmatprep.subr.bf16.mxu0 %v240
    %342 = vmatpush1.bf16.xpose.msra.mxu0 %v239
    %343 = vmatprep.subr.bf16.mxu0 %v248
    %344 = vmatpush1.bf16.xpose.msra.mxu0 %v247
    %345 = vmatprep.subr.bf16.mxu0 %v256
    %346 = vmatpush1.bf16.xpose.msra.mxu0 %v255
    %347 = vmatprep.subr.bf16.mxu0 %v264
    %348 = vmatpush1.bf16.xpose.msra.mxu0 %v263
    %349 = vmatprep.subr.bf16.mxu0 %v272
    %350 = vmatpush1.bf16.xpose.msra.mxu0 %v271
    %351 = vmatprep.subr.bf16.mxu0 %v280
    %352 = vmatpush1.bf16.xpose.msra.mxu0 %v279
    %353 = vmatprep.subr.bf16.mxu0 %v288
    %354 = vmatpush1.bf16.xpose.msra.mxu0 %v287
    %355 = vmatprep.subr.bf16.mxu0 %v296
    %356 = vmatpush1.bf16.xpose.msra.mxu0 %v295
    %357 = vmatprep.subr.bf16.mxu0 0
    %358 = vmatpush1.bf16.xpose.msra.mxu0 0
    %359 = vmatprep.subr.bf16.mxu0 0
    %360 = vmatpush1.bf16.xpose.msra.mxu0 0
    %361 = vmatprep.subr.bf16.mxu0 0
    %362 = vmatpush1.bf16.xpose.msra.mxu0 0
    %363 = vmatprep.subr.bf16.mxu0 0
    %364 = vmatpush1.bf16.xpose.msra.mxu0 0
    %365 = vmatprep.subr.bf16.mxu0 0
    %366 = vmatpush1.bf16.xpose.msra.mxu0 0
    %367 = vmatprep.subr.bf16.mxu0 0
    %368 = vmatpush1.bf16.xpose.msra.mxu0 0
    %369 = vmatprep.subr.bf16.mxu0 0
    %370 = vmatpush1.bf16.xpose.msra.mxu0 0
    %371 = vmatprep.subr.bf16.mxu0 0
    %372 = vmatpush1.bf16.xpose.msra.mxu0 0
    %373 = vmatprep.mubr.bf16.mxu0 %v104
    %374 = vmatmul.mubr.bf16.gmra.mrb[0].mxu0 %v103
    %v375 = vpop.f32.mrb[0].mxu0
    %v376 = vadd.f32 %v336, %v375
    %v377 = vpop.f32.mrb[0].mxu0
    %v378 = vpop.f32.mrb[0].mxu0
    %v379 = vpop.f32.mrb[0].mxu0
    %380 = vdwg.mxu0
    %381 = vmatprep.subr.bf16.mxu0 %v242
    %382 = vmatpush1.bf16.xpose.msra.mxu0 %v241
    %383 = vmatprep.subr.bf16.mxu0 %v250
    %384 = vmatpush1.bf16.xpose.msra.mxu0 %v249
    %385 = vmatprep.subr.bf16.mxu0 %v258
    %386 = vmatpush1.bf16.xpose.msra.mxu0 %v257
    %387 = vmatprep.subr.bf16.mxu0 %v266
    %388 = vmatpush1.bf16.xpose.msra.mxu0 %v265
    %389 = vmatprep.subr.bf16.mxu0 %v274
    %390 = vmatpush1.bf16.xpose.msra.mxu0 %v273
    %391 = vmatprep.subr.bf16.mxu0 %v282
    %392 = vmatpush1.bf16.xpose.msra.mxu0 %v281
    %393 = vmatprep.subr.bf16.mxu0 %v290
    %394 = vmatpush1.bf16.xpose.msra.mxu0 %v289
    %395 = vmatprep.subr.bf16.mxu0 %v298
    %396 = vmatpush1.bf16.xpose.msra.mxu0 %v297
    %397 = vmatprep.subr.bf16.mxu0 0
    %398 = vmatpush1.bf16.xpose.msra.mxu0 0
    %399 = vmatprep.subr.bf16.mxu0 0
    %400 = vmatpush1.bf16.xpose.msra.mxu0 0
    %401 = vmatprep.subr.bf16.mxu0 0
    %402 = vmatpush1.bf16.xpose.msra.mxu0 0
    %403 = vmatprep.subr.bf16.mxu0 0
    %404 = vmatpush1.bf16.xpose.msra.mxu0 0
    %405 = vmatprep.subr.bf16.mxu0 0
    %406 = vmatpush1.bf16.xpose.msra.mxu0 0
    %407 = vmatprep.subr.bf16.mxu0 0
    %408 = vmatpush1.bf16.xpose.msra.mxu0 0
    %409 = vmatprep.subr.bf16.mxu0 0
    %410 = vmatpush1.bf16.xpose.msra.mxu0 0
    %411 = vmatprep.subr.bf16.mxu0 0
    %412 = vmatpush1.bf16.xpose.msra.mxu0 0
    %413 = vmatprep.mubr.bf16.mxu0 %v106
    %414 = vmatmul.mubr.bf16.gmra.mrb[0].mxu0 %v105
    %v415 = vpop.f32.mrb[0].mxu0
    %v416 = vadd.f32 %v376, %v415
    %v417 = vpop.f32.mrb[0].mxu0
    %v418 = vpop.f32.mrb[0].mxu0
    %v419 = vpop.f32.mrb[0].mxu0
    %420 = vdwg.mxu0
    %421 = vmatprep.subr.bf16.mxu0 %v244
    %422 = vmatpush1.bf16.xpose.msra.mxu0 %v243
    %423 = vmatprep.subr.bf16.mxu0 %v252
    %424 = vmatpush1.bf16.xpose.msra.mxu0 %v251
    %425 = vmatprep.subr.bf16.mxu0 %v260
    %426 = vmatpush1.bf16.xpose.msra.mxu0 %v259
    %427 = vmatprep.subr.bf16.mxu0 %v268
    %428 = vmatpush1.bf16.xpose.msra.mxu0 %v267
    %429 = vmatprep.subr.bf16.mxu0 %v276
    %430 = vmatpush1.bf16.xpose.msra.mxu0 %v275
    %431 = vmatprep.subr.bf16.mxu0 %v284
    %432 = vmatpush1.bf16.xpose.msra.mxu0 %v283
    %433 = vmatprep.subr.bf16.mxu0 %v292
    %434 = vmatpush1.bf16.xpose.msra.mxu0 %v291
    %435 = vmatprep.subr.bf16.mxu0 %v300
    %436 = vmatpush1.bf16.xpose.msra.mxu0 %v299
    %437 = vmatprep.subr.bf16.mxu0 0
    %438 = vmatpush1.bf16.xpose.msra.mxu0 0
    %439 = vmatprep.subr.bf16.mxu0 0
    %440 = vmatpush1.bf16.xpose.msra.mxu0 0
    %441 = vmatprep.subr.bf16.mxu0 0
    %442 = vmatpush1.bf16.xpose.msra.mxu0 0
    %443 = vmatprep.subr.bf16.mxu0 0
    %444 = vmatpush1.bf16.xpose.msra.mxu0 0
    %445 = vmatprep.subr.bf16.mxu0 0
    %446 = vmatpush1.bf16.xpose.msra.mxu0 0
    %447 = vmatprep.subr.bf16.mxu0 0
    %448 = vmatpush1.bf16.xpose.msra.mxu0 0
    %449 = vmatprep.subr.bf16.mxu0 0
    %450 = vmatpush1.bf16.xpose.msra.mxu0 0
    %451 = vmatprep.subr.bf16.mxu0 0
    %452 = vmatpush1.bf16.xpose.msra.mxu0 0
    %453 = vmatprep.mubr.bf16.mxu0 %v108
    %454 = vmatmul.mubr.bf16.gmra.mrb[0].mxu0 %v107
    %v455 = vpop.f32.mrb[0].mxu0
    %v456 = vadd.f32 %v416, %v455
    %v457 = vpop.f32.mrb[0].mxu0
    %v458 = vpop.f32.mrb[0].mxu0
    %v459 = vpop.f32.mrb[0].mxu0
    %460 = vdwg.mxu0
    %v461 = vadd.f32 %v54, %v456
    %462 = vst [vmem:[#allocation2] sm:$0x3] %v461
    // Predicated region
    $region26: #{tpu_custom_call.1} parent=1 // pred_check
      %p463 = pneg %p42
    $region27: #{tpu_custom_call.1} parent=1 // pred_check_branch
      %465 = sbr.rel (%p463) target = $region29
    $region28: #{tpu_custom_call.1} parent=1 // pred_region
      %v466 = vld [vmem:[#allocation2] sm:$0x3]
      %467 = vst [vmem:[#allocation8] sm:$0x3] %v466
    $region29: #{tpu_custom_call.1} parent=1 // pred_fallthru
      _
    // Predicated region
    $region30: #{tpu_custom_call.1} parent=1 // pred_check
      _
    $region31: #{tpu_custom_call.1} parent=1 // pred_check_branch
      %469 = sbr.rel (0) target = $region33
    $region32: #{tpu_custom_call.1} parent=1 // pred_region
      %s471 = ssub.s32 32, 32
      %472 = vsyncadd [#allocation5], %s471
      %s474 = sshll.u32 [#allocation8], 4
      %s475 = int_to_ptr.vmem [resolvable:$true] %s474
      %477 = dma.vmem_to_hbm [thread:$0]  %s475, 32, %s3, [#allocation5]
    $region33: #{tpu_custom_call.1} parent=1 // pred_fallthru
      _
    // Predicated region
    $region34: #{tpu_custom_call.1} parent=1 // pred_check
      _
    $region35: #{tpu_custom_call.1} parent=1 // pred_check_branch
      %479 = sbr.rel (0) target = $region37
    $region36: #{tpu_custom_call.1} parent=1 // pred_region
      %480 = dma.done [#allocation5], 32
    $region37: #{tpu_custom_call.1} parent=1 // pred_fallthru
      _
    %481 = vsyncpa [#allocation4], 1
    %482 = vsyncpa [#allocation7], 1
    %483 = vsyncpa [#allocation5], 1

</llo_original>
